<compile_context>
chip_gen: v7x
topology: tpu7x:2x2x1
jax: 0.10.0
libtpu: 0.0.40
codegen_flags: <defaults>
</compile_context>

<pallas_src>
import functools

import jax
import jax.numpy as jnp
from jax import lax
from jax.experimental import pallas as pl
from jax.experimental.pallas import tpu as pltpu


def _round_up(x, m):
    return (x + m - 1) // m * m


def _cdiv(a, b):
    return -(-a // b)


# --------------------------------------------------------------------------
# Kernel 1: weighted cross entropy over [B*Q, C+1]  (F.cross_entropy w/ weight)
# Per-tile partial sums (Σ w·nll, Σ w) go to a lane-dense (num_tiles, 128)
# output; final divide happens outside (one scalar op).
# --------------------------------------------------------------------------
def _weighted_ce_kernel(logits_ref, tgt_ref, w_ref, out_ref, *, n_true, tm):
    pid = pl.program_id(0)

    logits = logits_ref[...].astype(jnp.float32)       # (tm, C1)
    tgt = tgt_ref[...]                                  # (tm, 1) int32
    w = w_ref[...].astype(jnp.float32)                  # (1, C1)
    tm_, c1 = logits.shape

    # Rows beyond n_true (partial last block) contain unspecified data: clamp
    # them to 0 so lse stays finite, and zero their weight below.
    row = pid * tm + lax.broadcasted_iota(jnp.int32, (tm_, 1), 0)
    row_valid = row < n_true                            # (tm, 1) bool
    logits = jnp.where(row_valid, logits, 0.0)

    m = jnp.max(logits, axis=-1, keepdims=True)
    lse = jnp.log(jnp.sum(jnp.exp(logits - m), axis=-1, keepdims=True)) + m

    # One-hot reduce of the selected logit / weight (no full (tm, C1) neg_logp).
    cls = lax.broadcasted_iota(jnp.int32, (tm_, c1), 1)
    sel = cls == tgt                                    # (tm, C1)
    w_sel = jnp.sum(jnp.where(sel, w, 0.0), axis=-1, keepdims=True)
    w_sel = jnp.where(row_valid, w_sel, 0.0)            # (tm, 1)
    logit_sel = jnp.sum(jnp.where(sel, logits, 0.0), axis=-1, keepdims=True)

    s_wnll = jnp.sum(w_sel * (lse - logit_sel))
    s_w = jnp.sum(w_sel)

    lane = lax.broadcasted_iota(jnp.int32, (1, 128), 1)
    out_ref[...] = jnp.where(lane == 0, s_wnll,
                             jnp.where(lane == 1, s_w, 0.0))


def weighted_cross_entropy(logits, targets, class_weights):
    """logits: (N, C+1) float; targets: (N,) int; class_weights: (C+1,) f32."""
    n, c1 = logits.shape
    logits = logits.astype(jnp.float32)                 # no padded copies
    tgt2 = targets.astype(jnp.int32).reshape(n, 1)
    w2 = class_weights.astype(jnp.float32).reshape(1, c1)

    # Single grid step whenever the whole logits slab fits comfortably in VMEM
    # (DETR-style N = B*Q almost always does); otherwise large row tiles to
    # amortize the ~0.35 us per-step overhead.
    if n <= 2048:
        tm = n
    else:
        tm = 512                                         # multiple of 8/16
    num_tiles = _cdiv(n, tm)

    est = 2 * (tm * c1 * 4 + tm * 4 + c1 * 4 + 128 * 4) + 4 * tm * c1 * 4
    vmem_limit = int(min(32 << 20, max(8 << 20, est + (1 << 20))))

    parts = pl.pallas_call(
        functools.partial(_weighted_ce_kernel, n_true=n, tm=tm),
        out_shape=jax.ShapeDtypeStruct((num_tiles, 128), jnp.float32),
        grid=(num_tiles,),
        in_specs=[
            pl.BlockSpec((tm, c1), lambda i: (i, 0)),    # last dim == full dim
            pl.BlockSpec((tm, 1), lambda i: (i, 0)),
            pl.BlockSpec((1, c1), lambda i: (0, 0)),
        ],
        out_specs=pl.BlockSpec((1, 128), lambda i: (i, 0)),
        compiler_params=pltpu.CompilerParams(
            dimension_semantics=("parallel",),
            vmem_limit_bytes=vmem_limit),
    )(logits, tgt2, w2)

    sums = jnp.sum(parts, axis=0)                        # (128,)
    denom = jnp.maximum(sums[1], 1e-12)                  # guard Σw == 0
    return sums[0] / denom


# --------------------------------------------------------------------------
# Kernel 2: fused bilinear point-sample (src + target masks) + sigmoid-CE +
# dice.  Batched over Tm masks per grid step, point axis processed in
# lane-dense chunks, sampling matmuls in bf16 on the MXU.  Per-mask partial
# results go to a lane-dense (Mpad, 128) output; grid axis is "parallel".
# --------------------------------------------------------------------------
def _point_mask_loss_kernel(coords_ref, src_ref, tgt_ref, out_ref, *,
                            p_true, p_chunk, n_chunks):
    src = src_ref[...]                                   # (Tm, H, W) bf16
    tgt = tgt_ref[...]                                   # (Tm, H, W) bf16
    tm, h, w = src.shape

    def chunk_accumulate(start, carry):
        bce_s, inter_s, p_s, t_s = carry
        coords = coords_ref[:, :, pl.ds(start, p_chunk)].astype(jnp.float32)
        xs = coords[:, 0, :]                             # (Tm, Pc)
        ys = coords[:, 1, :]

        # --- bilinear sampling weights (grid_sample, align_corners=False,
        #     zero padding: out-of-range indices never match the iota).
        px = xs * w - 0.5
        py = ys * h - 0.5
        x0 = jnp.floor(px)
        y0 = jnp.floor(py)
        fx1 = (px - x0)[:, None, :]
        fx0 = 1.0 - fx1
        fy1 = (py - y0)[:, None, :]
        fy0 = 1.0 - fy1
        x0i = x0.astype(jnp.int32)[:, None, :]
        y0i = y0.astype(jnp.int32)[:, None, :]
        x1i = x0i + 1
        y1i = y0i + 1

        xio = lax.broadcasted_iota(jnp.int32, (tm, w, p_chunk), 1)
        yio = lax.broadcasted_iota(jnp.int32, (tm, h, p_chunk), 1)
        # Keep compare/select math in f32; cast only the weight matrix fed to
        # the MXU to bf16 (v5e has no bf16 VPU path).
        wx = (jnp.where(xio == x0i, fx0, 0.0) +
              jnp.where(xio == x1i, fx1, 0.0))           # (Tm, W, Pc) f32
        wy = (jnp.where(yio == y0i, fy0, 0.0) +
              jnp.where(yio == y1i, fy1, 0.0))           # (Tm, H, Pc) f32
        wx_b = wx.astype(jnp.bfloat16)

        # sample(img)[m,p] = Σ_y wy[m,y,p] * (Σ_x img[m,y,x] * wx[m,x,p])
        src_rows = jnp.einsum('mhw,mwp->mhp', src, wx_b,
                              preferred_element_type=jnp.float32)
        tgt_rows = jnp.einsum('mhw,mwp->mhp', tgt, wx_b,
                              preferred_element_type=jnp.float32)
        x_pts = jnp.sum(wy * src_rows, axis=1)           # (Tm, Pc) f32
        y_pts = jnp.sum(wy * tgt_rows, axis=1)           # (Tm, Pc) f32

        # --- per-point losses (padded point lanes masked out) ---
        pcol = start + lax.broadcasted_iota(jnp.int32, (tm, p_chunk), 1)
        valid = (pcol < p_true).astype(jnp.float32)

        # single exp per element; BCE and sigmoid both derived from exp(-|x|).
        e = jnp.exp(-jnp.abs(x_pts))
        # log1p(e); e in (0, 1] so the plain form is accurate enough here.
        bce = (jnp.maximum(x_pts, 0.0) - x_pts * y_pts + jnp.log(1.0 + e))
        bce = bce * valid
        prob = jnp.where(x_pts >= 0.0, 1.0, e) * pl.reciprocal(1.0 + e,
                                                               approx=True)
        prob = prob * valid
        y_v = y_pts * valid

        return (bce_s + jnp.sum(bce, axis=1, keepdims=True),
                inter_s + jnp.sum(prob * y_v, axis=1, keepdims=True),
                p_s + jnp.sum(prob, axis=1, keepdims=True),
                t_s + jnp.sum(y_v, axis=1, keepdims=True))

    init = tuple(jnp.zeros((tm, 1), jnp.float32) for _ in range(4))
    if n_chunks == 1:
        bce_s, inter_s, p_s, t_s = chunk_accumulate(0, init)
    else:
        def body(c, carry):
            return chunk_accumulate(pl.multiple_of(c * p_chunk, p_chunk), carry)
        bce_s, inter_s, p_s, t_s = lax.fori_loop(
            0, n_chunks, body, init, unroll=(n_chunks <= 4))

    ce_m = bce_s / jnp.float32(p_true)                   # mean over points
    dice_m = 1.0 - (2.0 * inter_s + 1.0) * pl.reciprocal(p_s + t_s + 1.0,
                                                         approx=True)
    lane = lax.broadcasted_iota(jnp.int32, (tm, 128), 1)
    out_ref[...] = jnp.where(lane == 0, ce_m,
                             jnp.where(lane == 1, dice_m, 0.0))


def fused_point_mask_losses(src_masks, target_masks, point_coords, num_masks):
    """src_masks/target_masks: (M, H, W); point_coords: (M, P, 2) xy in [0,1]."""
    m, h, w = src_masks.shape
    p = point_coords.shape[1]

    p_chunk = min(512, _round_up(p, 128))                # lane-dense chunks
    pp = _round_up(p, p_chunk)
    n_chunks = pp // p_chunk

    tm_blk = m if m <= 16 else 8                         # masks per grid step
    m_pad = _round_up(m, tm_blk)

    # packed (x, y) coords: one input instead of two tiny per-step DMAs.
    coords = jnp.zeros((m_pad, 2, pp), jnp.float32)
    coords = coords.at[:m, 0, :p].set(point_coords[..., 0].astype(jnp.float32))
    coords = coords.at[:m, 1, :p].set(point_coords[..., 1].astype(jnp.float32))

    src_b = src_masks.astype(jnp.bfloat16)               # bf16 MXU operands
    tgt_b = target_masks.astype(jnp.bfloat16)
    if m_pad != m:
        pad = ((0, m_pad - m), (0, 0), (0, 0))
        src_b = jnp.pad(src_b, pad)
        tgt_b = jnp.pad(tgt_b, pad)

    est = (2 * (2 * tm_blk * h * w * 2 + tm_blk * 2 * pp * 4
                + tm_blk * 128 * 4)
           + tm_blk * ((h + w) * p_chunk * 6 + 2 * h * p_chunk * 4
                       + 16 * p_chunk * 4))
    vmem_limit = int(min(32 << 20, max(8 << 20, est + (2 << 20))))  # v7x-safe

    out = pl.pallas_call(
        functools.partial(_point_mask_loss_kernel, p_true=p, p_chunk=p_chunk,
                          n_chunks=n_chunks),
        out_shape=jax.ShapeDtypeStruct((m_pad, 128), jnp.float32),
        grid=(m_pad // tm_blk,),
        in_specs=[
            pl.BlockSpec((tm_blk, 2, pp), lambda i: (i, 0, 0)),
            pl.BlockSpec((tm_blk, h, w), lambda i: (i, 0, 0)),
            pl.BlockSpec((tm_blk, h, w), lambda i: (i, 0, 0)),
        ],
        out_specs=pl.BlockSpec((tm_blk, 128), lambda i: (i, 0)),
        compiler_params=pltpu.CompilerParams(
            dimension_semantics=("parallel",),
            vmem_limit_bytes=vmem_limit),
    )(coords, src_b, tgt_b)

    loss_mask = jnp.sum(out[:m, 0]) / num_masks
    loss_dice = jnp.sum(out[:m, 1]) / num_masks
    return loss_mask, loss_dice


# ------------------------------ plain-JAX glue -------------------------------

def point_sample(inp, coords):
    """detectron2 point_sample (bilinear grid_sample, align_corners=False,
    zero padding). inp: (N, 1, H, W); coords: (N, P, 2) in [0,1] (x, y).
    Returns (N, 1, P).  Only used for the uncertainty-based point selection."""
    n, c, h, w = inp.shape
    x = coords[..., 0] * w - 0.5
    y = coords[..., 1] * h - 0.5
    x0 = jnp.floor(x)
    y0 = jnp.floor(y)
    x1 = x0 + 1.0
    y1 = y0 + 1.0
    wx1 = x - x0
    wx0 = 1.0 - wx1
    wy1 = y - y0
    wy0 = 1.0 - wy1

    def gather(ix, iy):
        valid = (ix >= 0) & (ix <= w - 1) & (iy >= 0) & (iy <= h - 1)
        ixc = jnp.clip(ix, 0, w - 1).astype(jnp.int32)
        iyc = jnp.clip(iy, 0, h - 1).astype(jnp.int32)
        vals = jax.vmap(lambda img, yy, xx: img[0, yy, xx])(inp, iyc, ixc)
        return jnp.where(valid, vals, 0.0)

    out = (gather(x0, y0) * wx0 * wy0 + gather(x1, y0) * wx1 * wy0 +
           gather(x0, y1) * wx0 * wy1 + gather(x1, y1) * wx1 * wy1)
    return out[:, None, :]


def calculate_uncertainty(logits):
    assert logits.shape[1] == 1
    return -jnp.abs(logits)


def get_uncertain_point_coords_with_randomness(key, coarse_logits, num_points,
                                               oversample_ratio,
                                               importance_sample_ratio):
    # TODO(synk): top_k-based importance sampling over oversampled points stays
    # in plain JAX (data-dependent top_k has no clean Pallas equivalent).
    num_boxes = coarse_logits.shape[0]
    num_sampled = int(num_points * oversample_ratio)
    k1, k2 = jax.random.split(key)
    point_coords = jax.random.uniform(k1, (num_boxes, num_sampled, 2),
                                      dtype=jnp.float32)
    point_logits = point_sample(coarse_logits, point_coords)        # (N, 1, S)
    point_uncertainties = calculate_uncertainty(point_logits)       # (N, 1, S)
    num_uncertain = int(importance_sample_ratio * num_points)
    num_random = num_points - num_uncertain
    idx = lax.top_k(point_uncertainties[:, 0, :], num_uncertain)[1]  # (N, K)
    coords_sel = jnp.take_along_axis(point_coords, idx[:, :, None], axis=1)
    if num_random > 0:
        rand_coords = jax.random.uniform(k2, (num_boxes, num_random, 2),
                                         dtype=jnp.float32)
        coords_sel = jnp.concatenate([coords_sel, rand_coords], axis=1)
    return coords_sel


def identity_matcher(outputs, targets):
    # TODO(synk): Hungarian (linear_sum_assignment) matching has no clean Pallas
    # equivalent; a deterministic identity matcher is used instead (matcher is an
    # injected dependency of the original module).
    inds = []
    for t in targets:
        n = t['labels'].shape[0]
        inds.append((jnp.arange(n, dtype=jnp.int32),
                     jnp.arange(n, dtype=jnp.int32)))
    return inds


class SetCriterion:
    def __init__(self, num_classes, matcher, weight_dict, eos_coef, losses,
                 num_points, oversample_ratio, importance_sample_ratio):
        self.num_classes = num_classes
        self.matcher = matcher
        self.weight_dict = weight_dict
        self.eos_coef = eos_coef
        self.losses = losses
        ew = jnp.ones((num_classes + 1,), dtype=jnp.float32)
        self.empty_weight = ew.at[-1].set(eos_coef)
        self.num_points = num_points
        self.oversample_ratio = oversample_ratio
        self.importance_sample_ratio = importance_sample_ratio

    def _get_src_permutation_idx(self, indices):
        batch_idx = jnp.concatenate(
            [jnp.full_like(src, i) for i, (src, _) in enumerate(indices)])
        src_idx = jnp.concatenate([src for src, _ in indices])
        return batch_idx, src_idx

    def _get_tgt_permutation_idx(self, indices):
        batch_idx = jnp.concatenate(
            [jnp.full_like(tgt, i) for i, (_, tgt) in enumerate(indices)])
        tgt_idx = jnp.concatenate([tgt for _, tgt in indices])
        return batch_idx, tgt_idx

    def loss_labels(self, outputs, targets, indices, num_masks, key):
        src_logits = outputs['pred_logits'].astype(jnp.float32)  # (B, Q, C+1)
        b, q, c1 = src_logits.shape
        batch_idx, src_idx = self._get_src_permutation_idx(indices)
        target_classes_o = jnp.concatenate(
            [t['labels'][J] for t, (_, J) in zip(targets, indices)])
        target_classes = jnp.full((b, q), self.num_classes, dtype=jnp.int32)
        target_classes = target_classes.at[batch_idx, src_idx].set(
            target_classes_o.astype(jnp.int32))
        loss_ce = weighted_cross_entropy(
            src_logits.reshape(b * q, c1),
            target_classes.reshape(b * q),
            self.empty_weight)
        return {'loss_ce': loss_ce}

    def loss_masks(self, outputs, targets, indices, num_masks, key):
        src_idx = self._get_src_permutation_idx(indices)
        tgt_idx = self._get_tgt_permutation_idx(indices)
        src_masks = outputs['pred_masks'][src_idx[0], src_idx[1]]     # (M, H, W)
        target_masks = jnp.stack([t['masks'] for t in targets])       # (B, n, H, W)
        target_masks = target_masks.astype(src_masks.dtype)
        target_masks = target_masks[tgt_idx[0], tgt_idx[1]]           # (M, H, W)

        point_coords = get_uncertain_point_coords_with_randomness(
            key, src_masks[:, None], self.num_points, self.oversample_ratio,
            self.importance_sample_ratio)                             # (M, P, 2)

        # final point_sample (src + target) and sigmoid-CE/dice are fused into
        # one Pallas kernel -> no [M, P] HBM round-trip.
        loss_mask, loss_dice = fused_point_mask_losses(
            src_masks, target_masks, point_coords, num_masks)
        return {'loss_mask': loss_mask, 'loss_dice': loss_dice}

    def get_loss(self, loss, outputs, targets, indices, num_masks, key):
        loss_map = {'labels': self.loss_labels, 'masks': self.loss_masks}
        assert loss in loss_map
        return loss_map[loss](outputs, targets, indices, num_masks, key)

    def forward(self, outputs, targets, key):
        outputs_without_aux = {k: v for k, v in outputs.items()
                               if k != 'aux_outputs'}
        indices = self.matcher(outputs_without_aux, targets)
        num_masks = sum(int(t['labels'].shape[0]) for t in targets)
        # TODO(synk): no distributed all-reduce of num_masks here.
        num_masks = float(max(num_masks, 1))
        losses = {}
        for loss in self.losses:
            key, sub = jax.random.split(key)
            losses.update(self.get_loss(loss, outputs, targets, indices,
                                        num_masks, sub))
        if 'aux_outputs' in outputs:
            for i, aux_outputs in enumerate(outputs['aux_outputs']):
                indices = self.matcher(aux_outputs, targets)
                for loss in self.losses:
                    key, sub = jax.random.split(key)
                    l_dict = self.get_loss(loss, aux_outputs, targets, indices,
                                           num_masks, sub)
                    losses.update({k + f'_{i}': v for k, v in l_dict.items()})
        return losses


# ----------------------------------- main ------------------------------------

if __name__ == "__main__":
    key = jax.random.PRNGKey(0)
    B, Q, num_classes, H, W = 2, 8, 4, 16, 16
    n_tgt = 3                      # targets per image
    num_points = 16
    oversample_ratio = 3
    importance_sample_ratio = 0.75

    k1, k2, k3, k4, k5 = jax.random.split(key, 5)
    pred_logits = jax.random.normal(k1, (B, Q, num_classes + 1), jnp.float32)
    pred_masks = jax.random.normal(k2, (B, Q, H, W), jnp.float32)
    tgt_labels = jax.random.randint(k3, (B, n_tgt), 0, num_classes).astype(jnp.int32)
    tgt_masks = (jax.random.uniform(k4, (B, n_tgt, H, W)) > 0.5).astype(jnp.float32)

    outputs = {'pred_logits': pred_logits, 'pred_masks': pred_masks}
    targets = [{'labels': tgt_labels[b], 'masks': tgt_masks[b]} for b in range(B)]

    weight_dict = {'loss_ce': 1.0, 'loss_mask': 5.0, 'loss_dice': 5.0}
    criterion = SetCriterion(
        num_classes=num_classes,
        matcher=identity_matcher,
        weight_dict=weight_dict,
        eos_coef=0.1,
        losses=['labels', 'masks'],
        num_points=num_points,
        oversample_ratio=oversample_ratio,
        importance_sample_ratio=importance_sample_ratio,
    )

    losses = criterion.forward(outputs, targets, k5)
    losses = {k: jax.block_until_ready(v) for k, v in losses.items()}
    assert all(jnp.isfinite(v) for v in losses.values())
    print("KERNEL_OK")
</pallas_src>

<mosaic_0001>
module attributes {stable_mosaic.version = 11 : i64} {
  func.func @_weighted_ce_kernel(%arg0: i32, %arg1: memref<16x5xf32, #tpu.memory_space<vmem>>, %arg2: memref<16x1xi32, #tpu.memory_space<vmem>>, %arg3: memref<1x5xf32, #tpu.memory_space<vmem>>, %arg4: memref<1x128xf32, #tpu.memory_space<vmem>>) attributes {dimension_semantics = [#tpu.dimension_semantics<parallel>], iteration_bounds = array<i64: 1>, scalar_prefetch = 0 : i64, scratch_operands = 0 : i64, tpu.core_type = #tpu.core_type<tc>, window_params = [{transform_indices = @transform_0, window_bounds = array<i64: 16, 5>}, {transform_indices = @transform_1, window_bounds = array<i64: 16, 1>}, {pipeline_mode = #tpu.pipeline_mode<synchronous>, transform_indices = @transform_2, window_bounds = array<i64: 1, 5>}, {transform_indices = @transform_3, window_bounds = array<i64: 1, 128>}]} {
    %c0 = arith.constant 0 : index
    %c0_0 = arith.constant 0 : index
    %0 = vector.load %arg1[%c0, %c0_0] : memref<16x5xf32, #tpu.memory_space<vmem>>, vector<16x5xf32>
    %c0_1 = arith.constant 0 : index
    %c0_2 = arith.constant 0 : index
    %1 = vector.load %arg2[%c0_1, %c0_2] : memref<16x1xi32, #tpu.memory_space<vmem>>, vector<16x1xi32>
    %c0_3 = arith.constant 0 : index
    %c0_4 = arith.constant 0 : index
    %2 = vector.load %arg3[%c0_3, %c0_4] : memref<1x5xf32, #tpu.memory_space<vmem>>, vector<1x5xf32>
    %c16_i32 = arith.constant 16 : i32
    %3 = arith.muli %arg0, %c16_i32 : i32
    %4 = tpu.iota {dimensions = array<i32: 0>} : vector<16x1xi32>
    %5 = vector.broadcast %3 : i32 to vector<16x1xi32>
    %6 = arith.addi %5, %4 : vector<16x1xi32>
    %c16_i32_5 = arith.constant 16 : i32
    %7 = vector.broadcast %c16_i32_5 : i32 to vector<16x1xi32>
    %8 = arith.cmpi slt, %6, %7 : vector<16x1xi32>
    %cst = arith.constant 0.000000e+00 : f32
    %9 = vector.shape_cast %8 : vector<16x1xi1> to vector<16x1xi1>
    %10 = vector.broadcast %9 : vector<16x1xi1> to vector<16x5xi1>
    %11 = vector.broadcast %cst : f32 to vector<16x5xf32>
    %12 = arith.select %10, %0, %11 : vector<16x5xi1>, vector<16x5xf32>
    %cst_6 = arith.constant dense<0xFF800000> : vector<16xf32>
    %13 = vector.multi_reduction <maximumf>, %12, %cst_6 [1] : vector<16x5xf32> to vector<16xf32>
    %14 = vector.shape_cast %13 : vector<16xf32> to vector<16x1xf32>
    %15 = vector.broadcast %14 : vector<16x1xf32> to vector<16x5xf32>
    %16 = arith.subf %12, %15 : vector<16x5xf32>
    %17 = math.exp %16 : vector<16x5xf32>
    %cst_7 = arith.constant dense<0.000000e+00> : vector<16xf32>
    %18 = vector.multi_reduction <add>, %17, %cst_7 [1] : vector<16x5xf32> to vector<16xf32>
    %19 = vector.shape_cast %18 : vector<16xf32> to vector<16x1xf32>
    %20 = math.log %19 : vector<16x1xf32>
    %21 = arith.addf %20, %14 : vector<16x1xf32>
    %22 = tpu.iota {dimensions = array<i32: 1>} : vector<16x5xi32>
    %23 = vector.broadcast %1 : vector<16x1xi32> to vector<16x5xi32>
    %24 = arith.cmpi eq, %22, %23 : vector<16x5xi32>
    %cst_8 = arith.constant 0.000000e+00 : f32
    %25 = vector.shape_cast %2 : vector<1x5xf32> to vector<1x5xf32>
    %26 = vector.broadcast %25 : vector<1x5xf32> to vector<16x5xf32>
    %27 = vector.broadcast %cst_8 : f32 to vector<16x5xf32>
    %28 = arith.select %24, %26, %27 : vector<16x5xi1>, vector<16x5xf32>
    %cst_9 = arith.constant dense<0.000000e+00> : vector<16xf32>
    %29 = vector.multi_reduction <add>, %28, %cst_9 [1] : vector<16x5xf32> to vector<16xf32>
    %30 = vector.shape_cast %29 : vector<16xf32> to vector<16x1xf32>
    %cst_10 = arith.constant 0.000000e+00 : f32
    %31 = vector.broadcast %cst_10 : f32 to vector<16x1xf32>
    %32 = arith.select %8, %30, %31 : vector<16x1xi1>, vector<16x1xf32>
    %cst_11 = arith.constant 0.000000e+00 : f32
    %33 = vector.broadcast %cst_11 : f32 to vector<16x5xf32>
    %34 = arith.select %24, %12, %33 : vector<16x5xi1>, vector<16x5xf32>
    %cst_12 = arith.constant dense<0.000000e+00> : vector<16xf32>
    %35 = vector.multi_reduction <add>, %34, %cst_12 [1] : vector<16x5xf32> to vector<16xf32>
    %36 = vector.shape_cast %35 : vector<16xf32> to vector<16x1xf32>
    %37 = arith.subf %21, %36 : vector<16x1xf32>
    %38 = arith.mulf %32, %37 : vector<16x1xf32>
    %39 = vector.shape_cast %38 : vector<16x1xf32> to vector<1x16x1xf32>
    %cst_13 = arith.constant dense<0.000000e+00> : vector<1xf32>
    %40 = vector.multi_reduction <add>, %39, %cst_13 [1, 2] : vector<1x16x1xf32> to vector<1xf32>
    %41 = vector.shape_cast %40 : vector<1xf32> to vector<1x1x1xf32>
    %42 = vector.extract %41[0, 0, 0] : f32 from vector<1x1x1xf32>
    %43 = vector.shape_cast %32 : vector<16x1xf32> to vector<1x16x1xf32>
    %cst_14 = arith.constant dense<0.000000e+00> : vector<1xf32>
    %44 = vector.multi_reduction <add>, %43, %cst_14 [1, 2] : vector<1x16x1xf32> to vector<1xf32>
    %45 = vector.shape_cast %44 : vector<1xf32> to vector<1x1x1xf32>
    %46 = vector.extract %45[0, 0, 0] : f32 from vector<1x1x1xf32>
    %47 = tpu.iota {dimensions = array<i32: 1>} : vector<1x128xi32>
    %c0_i32 = arith.constant 0 : i32
    %48 = vector.broadcast %c0_i32 : i32 to vector<1x128xi32>
    %49 = arith.cmpi eq, %47, %48 : vector<1x128xi32>
    %c1_i32 = arith.constant 1 : i32
    %50 = vector.broadcast %c1_i32 : i32 to vector<1x128xi32>
    %51 = arith.cmpi eq, %47, %50 : vector<1x128xi32>
    %cst_15 = arith.constant 0.000000e+00 : f32
    %52 = vector.broadcast %46 : f32 to vector<1x128xf32>
    %53 = vector.broadcast %cst_15 : f32 to vector<1x128xf32>
    %54 = arith.select %51, %52, %53 : vector<1x128xi1>, vector<1x128xf32>
    %55 = vector.broadcast %42 : f32 to vector<1x128xf32>
    %56 = arith.select %49, %55, %54 : vector<1x128xi1>, vector<1x128xf32>
    %c0_16 = arith.constant 0 : index
    %c0_17 = arith.constant 0 : index
    %57 = vector.load %arg4[%c0_16, %c0_17] : memref<1x128xf32, #tpu.memory_space<vmem>>, vector<1x128xf32>
    tpu.vector_store %arg4[%c0_16, %c0_17], %56 {strides = array<i32>} : memref<1x128xf32, #tpu.memory_space<vmem>>, vector<1x128xf32>,
    return
  }
  func.func @transform_0(%arg0: i32) -> (i32, i32) {
    %c0_i32 = arith.constant 0 : i32
    %c0_i32_0 = arith.constant 0 : i32
    return %arg0, %c0_i32 : i32, i32
  }
  func.func @transform_1(%arg0: i32) -> (i32, i32) {
    %c0_i32 = arith.constant 0 : i32
    %c0_i32_0 = arith.constant 0 : i32
    return %arg0, %c0_i32 : i32, i32
  }
  func.func @transform_2(%arg0: i32) -> (i32, i32) {
    %c0_i32 = arith.constant 0 : i32
    %c0_i32_0 = arith.constant 0 : i32
    %c0_i32_1 = arith.constant 0 : i32
    return %c0_i32, %c0_i32_0 : i32, i32
  }
  func.func @transform_3(%arg0: i32) -> (i32, i32) {
    %c0_i32 = arith.constant 0 : i32
    %c0_i32_0 = arith.constant 0 : i32
    return %arg0, %c0_i32 : i32, i32
  }
}

</mosaic_0001>

<llo_original>
// kernel: tpu_custom_call.1
$region0: #{tpu_custom_call.1}
  #allocation0 [shape = 'u32[]', space=smem, size = 0x4, offset = 0x4, fixed_abs, tag = 'smem constant byte address 0x4 - core index']
  #allocation1 [shape = 'u32[144,128]{1,0:T(1,128)}', space=vmem, size = 0x12000, scoped, tag = 'internal scratch']
  %s0 = inlined_call_operand.vmem [shape: f32[16,5], index: 0, kind: input, shape index: {}]
  %s1 = inlined_call_operand.vmem [shape: s32[16,1], index: 1, kind: input, shape index: {}]
  %s2 = inlined_call_operand.vmem [shape: f32[1,5], index: 2, kind: input, shape index: {}]
  %s3 = inlined_call_operand.hbm [shape: f32[1,128], index: 3, kind: output, shape index: {}]
  %s4 = sld [smem:[#allocation0]]
  $region22: #{tpu_custom_call.1} parent=0
    _
  %s6 = ssub.s32 1, %s4
  %s7 = scalar_select 0, %s6, %s4
  $region1: #{tpu_custom_call.1} parent=0
    #allocation2 [shape = 'u8[512]{0}', space=vmem, size = 0x400, scoped, tag = 'output window, operand 0, single buffered']
    #allocation3 [shape = 's32[1]{0}', space=sflag, size = 0x4, scoped, tag = 'scoped memory for tpu_custom_call.1']
    %8 = vsyncpa [#allocation3], 0
    // Predicated region
    $region2: #{tpu_custom_call.1} parent=1 // pred_check
      _
    $region3: #{tpu_custom_call.1} parent=1 // pred_check_branch
      %10 = sbr.rel (0) target = $region5
    $region4: #{tpu_custom_call.1} parent=1 // pred_region
      _
    $region5: #{tpu_custom_call.1} parent=1 // pred_fallthru
      _
    // Predicated region
    $region6: #{tpu_custom_call.1} parent=1 // pred_check
      _
    $region7: #{tpu_custom_call.1} parent=1 // pred_check_branch
      %12 = sbr.rel (0) target = $region9
    $region8: #{tpu_custom_call.1} parent=1 // pred_region
      _
    $region9: #{tpu_custom_call.1} parent=1 // pred_fallthru
      _
    // Predicated region
    $region10: #{tpu_custom_call.1} parent=1 // pred_check
      _
    $region11: #{tpu_custom_call.1} parent=1 // pred_check_branch
      %14 = sbr.rel (0) target = $region13
    $region12: #{tpu_custom_call.1} parent=1 // pred_region
      _
    $region13: #{tpu_custom_call.1} parent=1 // pred_fallthru
      _
    %v15 = vld [vmem:[%s0] sm:$0xff]
    %v16 = vld [vmem:[%s0 + $0x8] sm:$0xff]
    %v17 = vld [vmem:[%s1] sm:$0xff]
    %v18 = vld [vmem:[%s1 + $0x8] sm:$0xff]
    %v19 = vld [vmem:[%s2] sm:$0x1]
    %s20 = smul.u32 0, 16
    %v21 = vlaneseq
    %v22 = vshrl.u32 %v21, 7
    %v23 = vadd.s32 %v22, 8
    %v24 = vstv %s20
    %v25 = vadd.s32 %v24, %v22
    %v26 = vadd.s32 %v24, %v23
    %vm27 = vcmp.lt.s32.totalorder %v25, 16
    %vm28 = vcmp.lt.s32.totalorder %v26, 16
    %v29 = vsel %vm27, 1, 0
    %v30 = vsel %vm28, 1, 0
    %vm31 = vcmp.eq.s32.totalorder %v29, 1
    %vm32 = vcmp.eq.s32.totalorder %v30, 1
    %v33 = vsel %vm31, %v15, 0.0
    %v34 = vsel %vm32, %v16, 0.0
    %vm35 = vcmask 39936
    %v36 = vsel %vm35, %v33, -inf
    %37 = vmax.xlane.f32.xlu0 %v36
    %v38 = vpop.xlane.xlu0 %37
    %v39 = vsel %vm35, %v34, -inf
    %40 = vmax.xlane.f32.xlu0 %v39
    %v41 = vpop.xlane.xlu0 %40
    %v42 = vsub.f32 %v33, %v38
    %v43 = vsub.f32 %v34, %v41
    %v44 = vmul.f32 %v42, 1.442695
    %v45 = vpow.pop %v44
    %v46 = vmul.f32 %v43, 1.442695
    %v47 = vpow.pop %v46
    %v48 = vsel %vm35, %v45, 0.0
    %49 = vadd.xlane.f32.xlu0 %v48
    %v50 = vpop.xlane.xlu0 %49
    %v51 = vsel %vm35, %v47, 0.0
    %52 = vadd.xlane.f32.xlu0 %v51
    %v53 = vpop.xlane.xlu0 %52
    %v54 = vlog2.pop %v50
    %v55 = vmul.f32 %v54, 0.6931472
    %v56 = vlog2.pop %v53
    %v57 = vmul.f32 %v56, 0.6931472
    %v58 = vadd.f32 %v55, %v38
    %v59 = vadd.f32 %v57, %v41
    %v60 = vlaneseq
    %v61 = vand.u32 %v60, 127
    %62 = vset.pattern.permute.xlu0 0
    %63 = vperm.xlu0 %62, %v17
    %v64 = vpop.permute.xlu0 %63
    %65 = vset.pattern.permute.xlu0 0
    %66 = vperm.xlu0 %65, %v18
    %v67 = vpop.permute.xlu0 %66
    %vm68 = vcmp.eq.s32.totalorder %v61, %v64
    %vm69 = vcmp.eq.s32.totalorder %v61, %v67
    %v71 = vlaneseq
    %v72 = vshrl.u32 %v71, 7
    %v73 = vsub.s32 0, %v72
    %v74 = vrot.slane %v19, %v73
    %v76 = vsel %vm68, %v74, 0.0
    %v77 = vsel %vm69, %v74, 0.0
    %v78 = vsel %vm35, %v76, 0.0
    %79 = vadd.xlane.f32.xlu0 %v78
    %v80 = vpop.xlane.xlu0 %79
    %v81 = vsel %vm35, %v77, 0.0
    %82 = vadd.xlane.f32.xlu0 %v81
    %v83 = vpop.xlane.xlu0 %82
    %v84 = vsel %vm27, %v80, 0.0
    %v85 = vsel %vm28, %v83, 0.0
    %v86 = vsel %vm68, %v33, 0.0
    %v87 = vsel %vm69, %v34, 0.0
    %v88 = vsel %vm35, %v86, 0.0
    %89 = vadd.xlane.f32.xlu0 %v88
    %v90 = vpop.xlane.xlu0 %89
    %v91 = vsel %vm35, %v87, 0.0
    %92 = vadd.xlane.f32.xlu0 %v91
    %v93 = vpop.xlane.xlu0 %92
    %v94 = vsub.f32 %v58, %v90
    %v95 = vsub.f32 %v59, %v93
    %v96 = vmul.f32 %v84, %v94
    %v97 = vmul.f32 %v85, %v95
    %vm98 = vcmask 7168
    %v99 = vsel %vm98, %v96, 0.0
    %v100 = vsel %vm98, %v97, 0.0
    %v101 = vadd.f32 %v99, %v100
    %102 = vadd.xlane.f32.xlu0 %v101
    %v103 = vpop.xlane.xlu0 %102
    %v104 = vrot.slane %v103, 4
    %v105 = vadd.f32 %v103, %v104
    %v106 = vrot.slane %v105, 2
    %v107 = vadd.f32 %v105, %v106
    %v108 = vrot.slane %v107, 1
    %v109 = vadd.f32 %v107, %v108
    %s110 = vtos %v109
    %v111 = vsel %vm98, %v84, 0.0
    %v112 = vsel %vm98, %v85, 0.0
    %v113 = vadd.f32 %v111, %v112
    %114 = vadd.xlane.f32.xlu0 %v113
    %v115 = vpop.xlane.xlu0 %114
    %v116 = vrot.slane %v115, 4
    %v117 = vadd.f32 %v115, %v116
    %v118 = vrot.slane %v117, 2
    %v119 = vadd.f32 %v117, %v118
    %v120 = vrot.slane %v119, 1
    %v121 = vadd.f32 %v119, %v120
    %s122 = vtos %v121
    %vm123 = vcmp.eq.s32.totalorder %v61, 0
    %vm124 = vcmp.eq.s32.totalorder %v61, 1
    %v125 = vstv %s122
    %v126 = vsel %vm124, %v125, 0.0
    %v127 = vstv %s110
    %v128 = vsel %vm123, %v127, %v126
    %129 = vst [vmem:[#allocation2] sm:$0x1] %v128
    // Predicated region
    $region14: #{tpu_custom_call.1} parent=1 // pred_check
      _
    $region15: #{tpu_custom_call.1} parent=1 // pred_check_branch
      %131 = sbr.rel (0) target = $region17
    $region16: #{tpu_custom_call.1} parent=1 // pred_region
      %s133 = ssub.s32 16, 16
      %134 = vsyncadd [#allocation3], %s133
      %s136 = sshll.u32 [#allocation2], 4
      %s137 = int_to_ptr.vmem [resolvable:$true] %s136
      %139 = dma.vmem_to_hbm [thread:$0]  %s137, 16, %s3, [#allocation3]
    $region17: #{tpu_custom_call.1} parent=1 // pred_fallthru
      _
    // Predicated region
    $region18: #{tpu_custom_call.1} parent=1 // pred_check
      _
    $region19: #{tpu_custom_call.1} parent=1 // pred_check_branch
      %141 = sbr.rel (0) target = $region21
    $region20: #{tpu_custom_call.1} parent=1 // pred_region
      %142 = dma.done [#allocation3], 16
    $region21: #{tpu_custom_call.1} parent=1 // pred_fallthru
      _
    %143 = vsyncpa [#allocation3], 1

</llo_original>
